<compile_context>
chip_gen: v7x
topology: tpu7x:2x2x1
jax: 0.10.0
libtpu: 0.0.40
codegen_flags: <defaults>
</compile_context>

<pallas_src>
from functools import partial

import jax
import jax.numpy as jnp
from jax.experimental import pallas as pl
from jax.experimental.pallas import tpu as pltpu


def _round_up(x, m):
    return (x + m - 1) // m * m


def _pad_lanes(n):
    return _round_up(max(int(n), 1), 128)


def _pad_sublanes(n):
    return _round_up(max(int(n), 1), 8)


def prepare_decoder_params(weight, bias):
    """One-time prep of nn.Linear params: (O, H) weight -> (H, O); bias -> (1, O)."""
    weight = jnp.asarray(weight)
    bias = jnp.asarray(bias)
    return weight.T, bias.reshape(1, -1)


def _choose_tile_m(M, H, O, itemsize, budget_bytes=36 << 20, tm_cap=2048):
    """Largest M-tile whose lane-padded, double-buffered footprint fits the budget."""
    per_row = 2 * (_pad_lanes(H) + _pad_lanes(O)) * itemsize          # x + out (2 bufs)
    resident = 2 * (_pad_sublanes(H) + 8) * _pad_lanes(O) * itemsize  # weight + bias
    avail = max(budget_bytes - resident, 1 << 20)
    tm = int(min(avail // per_row, tm_cap))
    tm = max(tm, 8)
    if tm >= M:
        return M                      # single full-extent block (no (8,128) constraint)
    return (tm // 8) * 8              # tiled: multiple of 8 sublanes


def _linear_kernel(x_ref, w_ref, b_ref, o_ref):
    """x: (TM, H), w: (H, O) resident, b: (1, O) resident, o: (TM, O)."""
    acc = jnp.dot(x_ref[...], w_ref[...], preferred_element_type=jnp.float32)
    o_ref[...] = (acc + b_ref[...].astype(jnp.float32)).astype(o_ref.dtype)


def _dst_head_forward(hidden_state, w_t, b_row):
    """hidden_state: (B, S, H); w_t: (H, O) pre-transposed weight; b_row: (1, O)."""
    B, S, H = hidden_state.shape
    O = w_t.shape[1]
    M = B * S

    x2d = hidden_state.reshape(M, H)
    isz = x2d.dtype.itemsize

    TM = _choose_tile_m(M, H, O, isz)
    grid_m = pl.cdiv(M, TM)

    # Explicit scoped-VMEM limit from the real (lane-padded) footprint; count two
    # buffers everywhere so the limit also covers the non-Buffered(1) fallback.
    x_bytes = 2 * _pad_sublanes(TM) * _pad_lanes(H) * isz
    o_bytes = 2 * _pad_sublanes(TM) * _pad_lanes(O) * isz
    w_bytes = 2 * _pad_sublanes(H) * _pad_lanes(O) * w_t.dtype.itemsize
    b_bytes = 2 * 8 * _pad_lanes(O) * b_row.dtype.itemsize
    vmem_limit = int(min(64 << 20,
                         max(x_bytes + o_bytes + w_bytes + b_bytes + (4 << 20),
                             16 << 20)))

    cost = pl.CostEstimate(
        flops=2 * M * H * O,
        transcendentals=0,
        bytes_accessed=(M * H * isz                      # streamed x
                        + H * O * w_t.dtype.itemsize     # resident weight (once)
                        + O * b_row.dtype.itemsize       # bias (once)
                        + M * O * isz))                  # output

    def _run(resident_mode):
        extra = {} if resident_mode is None else {"pipeline_mode": resident_mode}
        return pl.pallas_call(
            _linear_kernel,
            out_shape=jax.ShapeDtypeStruct((M, O), hidden_state.dtype),
            grid=(grid_m,),
            in_specs=[
                pl.BlockSpec((TM, H), lambda i: (i, 0)),           # streamed x tile
                pl.BlockSpec((H, O), lambda i: (0, 0), **extra),   # resident weight
                pl.BlockSpec((1, O), lambda i: (0, 0), **extra),   # resident bias
            ],
            out_specs=pl.BlockSpec((TM, O), lambda i: (i, 0)),
            # TODO(synk): on v7x, A/B pltpu.CORE_PARALLEL on this axis to split the
            # M grid across both TensorCores.
            compiler_params=pltpu.CompilerParams(
                dimension_semantics=("parallel",),
                vmem_limit_bytes=vmem_limit),
            cost_estimate=cost,
        )(x2d, w_t, b_row)

    try:
        resident_mode = pl.Buffered(1) if hasattr(pl, "Buffered") else None
        out2d = _run(resident_mode)
    except Exception:
        # Fallback: default double-buffered pipelining for the resident operands.
        out2d = _run(None)

    return out2d.reshape(B, S, O)


# --- gradient-reversal semantics via custom_vjp -----------------------------
@partial(jax.custom_vjp, nondiff_argnums=(3,))
def dst_prediction_head(hidden_state, w_t, b_row, alpha=1.0):
    """Forward of DSTPredictionHead: identity (grad-reverse) then x @ W.T + b."""
    return _dst_head_forward(hidden_state, w_t, b_row)


def _dst_head_fwd(hidden_state, w_t, b_row, alpha):
    out = _dst_head_forward(hidden_state, w_t, b_row)
    return out, (hidden_state, w_t, b_row)


def _dst_head_bwd(alpha, res, g):
    hidden_state, w_t, b_row = res
    B, S, H = hidden_state.shape
    O = w_t.shape[1]
    M = B * S
    g2 = g.reshape(M, O)
    x2 = hidden_state.reshape(M, H)

    # Gradient reversal: fold -alpha into the small (H, O) weight once rather than
    # paying an extra elementwise pass over the (M, H) dx.
    w_rev = (-alpha) * w_t                                             # (H, O)
    dx = jnp.dot(g2, w_rev.T, preferred_element_type=jnp.float32)      # (M, H)

    # Decoder parameter grads are NOT reversed (matches the PyTorch module).
    dw_t = jnp.einsum("mh,mo->ho", x2, g2,
                      preferred_element_type=jnp.float32)              # (H, O)
    db = jnp.sum(g2.astype(jnp.float32), axis=0, keepdims=True)        # (1, O)

    return (dx.reshape(hidden_state.shape).astype(hidden_state.dtype),
            dw_t.astype(w_t.dtype),
            db.astype(b_row.dtype))


dst_prediction_head.defvjp(_dst_head_fwd, _dst_head_bwd)


if __name__ == "__main__":
    # Small shapes consistent with the module: hidden_size=32, output_size=16.
    B, S, H, O = 2, 8, 32, 16
    alpha = 1.0

    key = jax.random.PRNGKey(0)
    k_x, k_w, k_b = jax.random.split(key, 3)

    hidden_state = jax.random.normal(k_x, (B, S, H), dtype=jnp.float32)
    # nn.Linear(H, O) params in PyTorch layout: weight (O, H), bias (O,)
    weight = jax.random.normal(k_w, (O, H), dtype=jnp.float32) * 0.02
    bias = jax.random.normal(k_b, (O,), dtype=jnp.float32) * 0.02

    # One-time parameter prep (hoisted out of the per-call path).
    w_t, b_row = prepare_decoder_params(weight, bias)

    out = dst_prediction_head(hidden_state, w_t, b_row, alpha)
    out = jax.block_until_ready(out)

    # Forward reference (GradReverse is identity in the forward pass).
    ref = hidden_state @ weight.T + bias
    assert out.shape == (B, S, O)
    assert out.dtype == hidden_state.dtype
    assert jnp.allclose(out, ref, atol=1e-5, rtol=1e-5)

    # Gradient reversal check: d(sum out)/dx == -alpha * broadcast(W.sum(0)).
    dx = jax.grad(
        lambda x: dst_prediction_head(x, w_t, b_row, alpha).sum())(hidden_state)
    dx = jax.block_until_ready(dx)
    dx_ref = -alpha * jnp.broadcast_to(weight.sum(axis=0), hidden_state.shape)
    assert jnp.allclose(dx, dx_ref, atol=1e-5, rtol=1e-5)

    # Decoder grads are NOT reversed and keep their own dtypes.
    dw_t, db = jax.grad(
        lambda w, b: dst_prediction_head(hidden_state, w, b, alpha).sum(),
        argnums=(0, 1))(w_t, b_row)
    dw_t = jax.block_until_ready(dw_t)
    x2 = hidden_state.reshape(B * S, H)
    assert jnp.allclose(dw_t, jnp.broadcast_to(x2.sum(0)[:, None], (H, O)),
                        atol=1e-4, rtol=1e-4)
    assert jnp.allclose(db, jnp.full((1, O), float(B * S)), atol=1e-5, rtol=1e-5)
    assert db.dtype == b_row.dtype

    print("KERNEL_OK")
</pallas_src>

<mosaic_0001>
module attributes {stable_mosaic.version = 11 : i64} {
  func.func @_linear_kernel(%arg0: i32, %arg1: memref<16x32xf32, #tpu.memory_space<vmem>>, %arg2: memref<32x16xf32, #tpu.memory_space<vmem>>, %arg3: memref<1x16xf32, #tpu.memory_space<vmem>>, %arg4: memref<16x16xf32, #tpu.memory_space<vmem>>) attributes {dimension_semantics = [#tpu.dimension_semantics<parallel>], iteration_bounds = array<i64: 1>, scalar_prefetch = 0 : i64, scratch_operands = 0 : i64, tpu.core_type = #tpu.core_type<tc>, window_params = [{transform_indices = @transform_0, window_bounds = array<i64: 16, 32>}, {pipeline_mode = #tpu.pipeline_mode<synchronous>, transform_indices = @transform_1, window_bounds = array<i64: 32, 16>}, {pipeline_mode = #tpu.pipeline_mode<synchronous>, transform_indices = @transform_2, window_bounds = array<i64: 1, 16>}, {transform_indices = @transform_3, window_bounds = array<i64: 16, 16>}]} {
    %c0 = arith.constant 0 : index
    %c0_0 = arith.constant 0 : index
    %0 = vector.load %arg1[%c0, %c0_0] : memref<16x32xf32, #tpu.memory_space<vmem>>, vector<16x32xf32>
    %c0_1 = arith.constant 0 : index
    %c0_2 = arith.constant 0 : index
    %1 = vector.load %arg2[%c0_1, %c0_2] : memref<32x16xf32, #tpu.memory_space<vmem>>, vector<32x16xf32>
    %cst = arith.constant dense<0.000000e+00> : vector<16x16xf32>
    %2 = tpu.matmul %0, %1, %cst {dimension_numbers = #tpu.dot_dimension_numbers<[1], [0], [0], [1], [0, 0, 1, 1], [], []>} : vector<16x32xf32>, vector<32x16xf32>, vector<16x16xf32> -> vector<16x16xf32>
    %c0_3 = arith.constant 0 : index
    %c0_4 = arith.constant 0 : index
    %3 = vector.load %arg3[%c0_3, %c0_4] : memref<1x16xf32, #tpu.memory_space<vmem>>, vector<1x16xf32>
    %4 = vector.broadcast %3 : vector<1x16xf32> to vector<16x16xf32>
    %5 = arith.addf %2, %4 : vector<16x16xf32>
    %c0_5 = arith.constant 0 : index
    %c0_6 = arith.constant 0 : index
    %6 = vector.load %arg4[%c0_5, %c0_6] : memref<16x16xf32, #tpu.memory_space<vmem>>, vector<16x16xf32>
    tpu.vector_store %arg4[%c0_5, %c0_6], %5 {strides = array<i32>} : memref<16x16xf32, #tpu.memory_space<vmem>>, vector<16x16xf32>,
    return
  }
  func.func @transform_0(%arg0: i32) -> (i32, i32) {
    %c0_i32 = arith.constant 0 : i32
    %c0_i32_0 = arith.constant 0 : i32
    return %arg0, %c0_i32 : i32, i32
  }
  func.func @transform_1(%arg0: i32) -> (i32, i32) {
    %c0_i32 = arith.constant 0 : i32
    %c0_i32_0 = arith.constant 0 : i32
    %c0_i32_1 = arith.constant 0 : i32
    return %c0_i32, %c0_i32_0 : i32, i32
  }
  func.func @transform_2(%arg0: i32) -> (i32, i32) {
    %c0_i32 = arith.constant 0 : i32
    %c0_i32_0 = arith.constant 0 : i32
    %c0_i32_1 = arith.constant 0 : i32
    return %c0_i32, %c0_i32_0 : i32, i32
  }
  func.func @transform_3(%arg0: i32) -> (i32, i32) {
    %c0_i32 = arith.constant 0 : i32
    %c0_i32_0 = arith.constant 0 : i32
    return %arg0, %c0_i32 : i32, i32
  }
}

module attributes {stable_mosaic.version = 11 : i64} {
  func.func @_linear_kernel(%arg0: i32, %arg1: memref<16x32xf32, #tpu.memory_space<vmem>>, %arg2: memref<32x16xf32, #tpu.memory_space<vmem>>, %arg3: memref<1x16xf32, #tpu.memory_space<vmem>>, %arg4: memref<16x16xf32, #tpu.memory_space<vmem>>) attributes {dimension_semantics = [#tpu.dimension_semantics<parallel>], iteration_bounds = array<i64: 1>, scalar_prefetch = 0 : i64, scratch_operands = 0 : i64, tpu.core_type = #tpu.core_type<tc>, window_params = [{transform_indices = @transform_0, window_bounds = array<i64: 16, 32>}, {pipeline_mode = #tpu.pipeline_mode<synchronous>, transform_indices = @transform_1, window_bounds = array<i64: 32, 16>}, {pipeline_mode = #tpu.pipeline_mode<synchronous>, transform_indices = @transform_2, window_bounds = array<i64: 1, 16>}, {transform_indices = @transform_3, window_bounds = array<i64: 16, 16>}]} {
    %c0 = arith.constant 0 : index
    %c0_0 = arith.constant 0 : index
    %0 = vector.load %arg1[%c0, %c0_0] : memref<16x32xf32, #tpu.memory_space<vmem>>, vector<16x32xf32>
    %c0_1 = arith.constant 0 : index
    %c0_2 = arith.constant 0 : index
    %1 = vector.load %arg2[%c0_1, %c0_2] : memref<32x16xf32, #tpu.memory_space<vmem>>, vector<32x16xf32>
    %cst = arith.constant dense<0.000000e+00> : vector<16x16xf32>
    %2 = tpu.matmul %0, %1, %cst {dimension_numbers = #tpu.dot_dimension_numbers<[1], [0], [0], [1], [0, 0, 1, 1], [], []>} : vector<16x32xf32>, vector<32x16xf32>, vector<16x16xf32> -> vector<16x16xf32>
    %c0_3 = arith.constant 0 : index
    %c0_4 = arith.constant 0 : index
    %3 = vector.load %arg3[%c0_3, %c0_4] : memref<1x16xf32, #tpu.memory_space<vmem>>, vector<1x16xf32>
    %4 = vector.broadcast %3 : vector<1x16xf32> to vector<16x16xf32>
    %5 = arith.addf %2, %4 : vector<16x16xf32>
    %c0_5 = arith.constant 0 : index
    %c0_6 = arith.constant 0 : index
    %6 = vector.load %arg4[%c0_5, %c0_6] : memref<16x16xf32, #tpu.memory_space<vmem>>, vector<16x16xf32>
    tpu.vector_store %arg4[%c0_5, %c0_6], %5 {strides = array<i32>} : memref<16x16xf32, #tpu.memory_space<vmem>>, vector<16x16xf32>,
    return
  }
  func.func @transform_0(%arg0: i32) -> (i32, i32) {
    %c0_i32 = arith.constant 0 : i32
    %c0_i32_0 = arith.constant 0 : i32
    return %arg0, %c0_i32 : i32, i32
  }
  func.func @transform_1(%arg0: i32) -> (i32, i32) {
    %c0_i32 = arith.constant 0 : i32
    %c0_i32_0 = arith.constant 0 : i32
    %c0_i32_1 = arith.constant 0 : i32
    return %c0_i32, %c0_i32_0 : i32, i32
  }
  func.func @transform_2(%arg0: i32) -> (i32, i32) {
    %c0_i32 = arith.constant 0 : i32
    %c0_i32_0 = arith.constant 0 : i32
    %c0_i32_1 = arith.constant 0 : i32
    return %c0_i32, %c0_i32_0 : i32, i32
  }
  func.func @transform_3(%arg0: i32) -> (i32, i32) {
    %c0_i32 = arith.constant 0 : i32
    %c0_i32_0 = arith.constant 0 : i32
    return %arg0, %c0_i32 : i32, i32
  }
}

</mosaic_0001>

<llo_original>
// kernel: tpu_custom_call.1
$region0: #{tpu_custom_call.1}
  #allocation0 [shape = 'u32[]', space=smem, size = 0x4, offset = 0x4, fixed_abs, tag = 'smem constant byte address 0x4 - core index']
  #allocation1 [shape = 'u32[144,128]{1,0:T(1,128)}', space=vmem, size = 0x12000, scoped, tag = 'internal scratch']
  %s0 = inlined_call_operand.vmem [shape: f32[16,32], index: 0, kind: input, shape index: {}]
  %s1 = inlined_call_operand.vmem [shape: f32[32,16], index: 1, kind: input, shape index: {}]
  %s2 = inlined_call_operand.vmem [shape: f32[1,16], index: 2, kind: input, shape index: {}]
  %s3 = inlined_call_operand.hbm [shape: f32[16,16], index: 3, kind: output, shape index: {}]
  %s4 = sld [smem:[#allocation0]]
  $region22: #{tpu_custom_call.1} parent=0
    _
  %s6 = ssub.s32 1, %s4
  %s7 = scalar_select 0, %s6, %s4
  $region1: #{tpu_custom_call.1} parent=0
    #allocation2 [shape = 'u8[8192]{0}', space=vmem, size = 0x2000, scoped, tag = 'output window, operand 0, single buffered']
    #allocation3 [shape = 's32[1]{0}', space=sflag, size = 0x4, scoped, tag = 'scoped memory for tpu_custom_call.1']
    %8 = vsyncpa [#allocation3], 0
    // Predicated region
    $region2: #{tpu_custom_call.1} parent=1 // pred_check
      _
    $region3: #{tpu_custom_call.1} parent=1 // pred_check_branch
      %10 = sbr.rel (0) target = $region5
    $region4: #{tpu_custom_call.1} parent=1 // pred_region
      _
    $region5: #{tpu_custom_call.1} parent=1 // pred_fallthru
      _
    // Predicated region
    $region6: #{tpu_custom_call.1} parent=1 // pred_check
      _
    $region7: #{tpu_custom_call.1} parent=1 // pred_check_branch
      %12 = sbr.rel (0) target = $region9
    $region8: #{tpu_custom_call.1} parent=1 // pred_region
      _
    $region9: #{tpu_custom_call.1} parent=1 // pred_fallthru
      _
    // Predicated region
    $region10: #{tpu_custom_call.1} parent=1 // pred_check
      _
    $region11: #{tpu_custom_call.1} parent=1 // pred_check_branch
      %14 = sbr.rel (0) target = $region13
    $region12: #{tpu_custom_call.1} parent=1 // pred_region
      _
    $region13: #{tpu_custom_call.1} parent=1 // pred_fallthru
      _
    %v15 = vld [vmem:[%s0] sm:$0xff]
    %v16 = vld [vmem:[%s0 + $0x8] sm:$0xff]
    %v17 = vld [vmem:[%s1] sm:$0xff]
    %v18 = vld [vmem:[%s1 + $0x8] sm:$0xff]
    %v19 = vld [vmem:[%s1 + $0x10] sm:$0xff]
    %v20 = vld [vmem:[%s1 + $0x18] sm:$0xff]
    %v21 = vld [vmem:[%s2] sm:$0x1]
    %v23 = vlaneseq
    %v24 = vshrl.u32 %v23, 7
    %v25 = vsub.s32 0, %v24
    %v26 = vrot.slane %v21, %v25
    %vm28 = vcmask 261120
    %v30 = vsel %vm28, %v15, 0
    %v33 = vsel %vm28, %v16, 0
    %35 = vmatprep.subr.mxu0 0.0
    %36 = vmatpush1.msra.mxu0 %v17
    %37 = vmatprep.subr.mxu0 0.0
    %38 = vmatpush1.msra.mxu0 %v18
    %39 = vmatprep.subr.mxu0 0.0
    %40 = vmatpush1.msra.mxu0 %v19
    %41 = vmatprep.subr.mxu0 0.0
    %42 = vmatpush1.msra.mxu0 %v20
    %43 = vmatprep.subr.mxu0 0.0
    %44 = vmatpush1.msra.mxu0 0.0
    %45 = vmatprep.subr.mxu0 0.0
    %46 = vmatpush1.msra.mxu0 0.0
    %47 = vmatprep.subr.mxu0 0.0
    %48 = vmatpush1.msra.mxu0 0.0
    %49 = vmatprep.subr.mxu0 0.0
    %50 = vmatpush1.msra.mxu0 0.0
    %51 = vmatprep.subr.mxu0 0.0
    %52 = vmatpush1.msra.mxu0 0.0
    %53 = vmatprep.subr.mxu0 0.0
    %54 = vmatpush1.msra.mxu0 0.0
    %55 = vmatprep.subr.mxu0 0.0
    %56 = vmatpush1.msra.mxu0 0.0
    %57 = vmatprep.subr.mxu0 0.0
    %58 = vmatpush1.msra.mxu0 0.0
    %59 = vmatprep.subr.mxu0 0.0
    %60 = vmatpush1.msra.mxu0 0.0
    %61 = vmatprep.subr.mxu0 0.0
    %62 = vmatpush1.msra.mxu0 0.0
    %63 = vmatprep.subr.mxu0 0.0
    %64 = vmatpush1.msra.mxu0 0.0
    %65 = vmatprep.subr.mxu0 0.0
    %66 = vmatpush1.msra.mxu0 0.0
    %67 = vmatprep.subr.mxu0 0.0
    %68 = vmatpush1.msra.mxu0 0.0
    %69 = vmatprep.subr.mxu0 0.0
    %70 = vmatpush1.msra.mxu0 0.0
    %71 = vmatprep.subr.mxu0 0.0
    %72 = vmatpush1.msra.mxu0 0.0
    %73 = vmatprep.subr.mxu0 0.0
    %74 = vmatpush1.msra.mxu0 0.0
    %75 = vmatprep.subr.mxu0 0.0
    %76 = vmatpush1.msra.mxu0 0.0
    %77 = vmatprep.subr.mxu0 0.0
    %78 = vmatpush1.msra.mxu0 0.0
    %79 = vmatprep.subr.mxu0 0.0
    %80 = vmatpush1.msra.mxu0 0.0
    %81 = vmatprep.subr.mxu0 0.0
    %82 = vmatpush1.msra.mxu0 0.0
    %83 = vmatprep.subr.mxu0 0.0
    %84 = vmatpush1.msra.mxu0 0.0
    %85 = vmatprep.subr.mxu0 0.0
    %86 = vmatpush1.msra.mxu0 0.0
    %87 = vmatprep.subr.mxu0 0.0
    %88 = vmatpush1.msra.mxu0 0.0
    %89 = vmatprep.subr.mxu0 0.0
    %90 = vmatpush1.msra.mxu0 0.0
    %91 = vmatprep.subr.mxu0 0.0
    %92 = vmatpush1.msra.mxu0 0.0
    %93 = vmatprep.subr.mxu0 0.0
    %94 = vmatpush1.msra.mxu0 0.0
    %95 = vmatprep.subr.mxu0 0.0
    %96 = vmatpush1.msra.mxu0 0.0
    %97 = vmatprep.subr.mxu0 0.0
    %98 = vmatpush1.msra.mxu0 0.0
    %99 = vmatprep.mubr.f32.mxu0 0.0
    %100 = vmatmul.mubr.f32.gmra.mrb[0].mxu0 %v30
    %v101 = vpop.f32.mrb[0].mxu0
    %v102 = vadd.f32 %v26, %v101
    %v103 = vpop.f32.mrb[0].mxu0
    %104 = vmatprep.mubr.f32.mxu0 0.0
    %105 = vmatmul.mubr.f32.gmra.mrb[0].mxu0 %v33
    %v106 = vpop.f32.mrb[0].mxu0
    %v107 = vadd.f32 %v26, %v106
    %v108 = vpop.f32.mrb[0].mxu0
    %109 = vdwg.mxu0
    %vm110 = vcmask 130048
    %111 = vst.msk [vmem:[#allocation2] sm:$0xff] %vm110, %v102
    %112 = vst.msk [vmem:[#allocation2 + $0x8] sm:$0xff] %vm110, %v107
    // Predicated region
    $region14: #{tpu_custom_call.1} parent=1 // pred_check
      _
    $region15: #{tpu_custom_call.1} parent=1 // pred_check_branch
      %114 = sbr.rel (0) target = $region17
    $region16: #{tpu_custom_call.1} parent=1 // pred_region
      %s116 = ssub.s32 256, 256
      %117 = vsyncadd [#allocation3], %s116
      %s118 = sshll.u32 [#allocation2], 4
      %s119 = int_to_ptr.vmem [resolvable:$true] %s118
      %124 = dma.vmem_to_hbm [thread:$0]  %s119, 256, %s3, [#allocation3], 128, 128, 8
    $region17: #{tpu_custom_call.1} parent=1 // pred_fallthru
      _
    // Predicated region
    $region18: #{tpu_custom_call.1} parent=1 // pred_check
      _
    $region19: #{tpu_custom_call.1} parent=1 // pred_check_branch
      %126 = sbr.rel (0) target = $region21
    $region20: #{tpu_custom_call.1} parent=1 // pred_region
      %127 = dma.done [#allocation3], 256
    $region21: #{tpu_custom_call.1} parent=1 // pred_fallthru
      _
    %128 = vsyncpa [#allocation3], 1

// kernel: tpu_custom_call.1
$region0: #{tpu_custom_call.1}
  #allocation0 [shape = 'u32[]', space=smem, size = 0x4, offset = 0x4, fixed_abs, tag = 'smem constant byte address 0x4 - core index']
  #allocation1 [shape = 'u32[144,128]{1,0:T(1,128)}', space=vmem, size = 0x12000, scoped, tag = 'internal scratch']
  %s0 = inlined_call_operand.vmem [shape: f32[16,32], index: 0, kind: input, shape index: {}]
  %s1 = inlined_call_operand.vmem [shape: f32[32,16], index: 1, kind: input, shape index: {}]
  %s2 = inlined_call_operand.vmem [shape: f32[1,16], index: 2, kind: input, shape index: {}]
  %s3 = inlined_call_operand.hbm [shape: f32[16,16], index: 3, kind: output, shape index: {}]
  %s4 = sld [smem:[#allocation0]]
  $region22: #{tpu_custom_call.1} parent=0
    _
  %s6 = ssub.s32 1, %s4
  %s7 = scalar_select 0, %s6, %s4
  $region1: #{tpu_custom_call.1} parent=0
    #allocation2 [shape = 'u8[8192]{0}', space=vmem, size = 0x2000, scoped, tag = 'output window, operand 0, single buffered']
    #allocation3 [shape = 's32[1]{0}', space=sflag, size = 0x4, scoped, tag = 'scoped memory for tpu_custom_call.1']
    %8 = vsyncpa [#allocation3], 0
    // Predicated region
    $region2: #{tpu_custom_call.1} parent=1 // pred_check
      _
    $region3: #{tpu_custom_call.1} parent=1 // pred_check_branch
      %10 = sbr.rel (0) target = $region5
    $region4: #{tpu_custom_call.1} parent=1 // pred_region
      _
    $region5: #{tpu_custom_call.1} parent=1 // pred_fallthru
      _
    // Predicated region
    $region6: #{tpu_custom_call.1} parent=1 // pred_check
      _
    $region7: #{tpu_custom_call.1} parent=1 // pred_check_branch
      %12 = sbr.rel (0) target = $region9
    $region8: #{tpu_custom_call.1} parent=1 // pred_region
      _
    $region9: #{tpu_custom_call.1} parent=1 // pred_fallthru
      _
    // Predicated region
    $region10: #{tpu_custom_call.1} parent=1 // pred_check
      _
    $region11: #{tpu_custom_call.1} parent=1 // pred_check_branch
      %14 = sbr.rel (0) target = $region13
    $region12: #{tpu_custom_call.1} parent=1 // pred_region
      _
    $region13: #{tpu_custom_call.1} parent=1 // pred_fallthru
      _
    %v15 = vld [vmem:[%s0] sm:$0xff]
    %v16 = vld [vmem:[%s0 + $0x8] sm:$0xff]
    %v17 = vld [vmem:[%s1] sm:$0xff]
    %v18 = vld [vmem:[%s1 + $0x8] sm:$0xff]
    %v19 = vld [vmem:[%s1 + $0x10] sm:$0xff]
    %v20 = vld [vmem:[%s1 + $0x18] sm:$0xff]
    %v21 = vld [vmem:[%s2] sm:$0x1]
    %v23 = vlaneseq
    %v24 = vshrl.u32 %v23, 7
    %v25 = vsub.s32 0, %v24
    %v26 = vrot.slane %v21, %v25
    %vm28 = vcmask 261120
    %v30 = vsel %vm28, %v15, 0
    %v33 = vsel %vm28, %v16, 0
    %35 = vmatprep.subr.mxu0 0.0
    %36 = vmatpush1.msra.mxu0 %v17
    %37 = vmatprep.subr.mxu0 0.0
    %38 = vmatpush1.msra.mxu0 %v18
    %39 = vmatprep.subr.mxu0 0.0
    %40 = vmatpush1.msra.mxu0 %v19
    %41 = vmatprep.subr.mxu0 0.0
    %42 = vmatpush1.msra.mxu0 %v20
    %43 = vmatprep.subr.mxu0 0.0
    %44 = vmatpush1.msra.mxu0 0.0
    %45 = vmatprep.subr.mxu0 0.0
    %46 = vmatpush1.msra.mxu0 0.0
    %47 = vmatprep.subr.mxu0 0.0
    %48 = vmatpush1.msra.mxu0 0.0
    %49 = vmatprep.subr.mxu0 0.0
    %50 = vmatpush1.msra.mxu0 0.0
    %51 = vmatprep.subr.mxu0 0.0
    %52 = vmatpush1.msra.mxu0 0.0
    %53 = vmatprep.subr.mxu0 0.0
    %54 = vmatpush1.msra.mxu0 0.0
    %55 = vmatprep.subr.mxu0 0.0
    %56 = vmatpush1.msra.mxu0 0.0
    %57 = vmatprep.subr.mxu0 0.0
    %58 = vmatpush1.msra.mxu0 0.0
    %59 = vmatprep.subr.mxu0 0.0
    %60 = vmatpush1.msra.mxu0 0.0
    %61 = vmatprep.subr.mxu0 0.0
    %62 = vmatpush1.msra.mxu0 0.0
    %63 = vmatprep.subr.mxu0 0.0
    %64 = vmatpush1.msra.mxu0 0.0
    %65 = vmatprep.subr.mxu0 0.0
    %66 = vmatpush1.msra.mxu0 0.0
    %67 = vmatprep.subr.mxu0 0.0
    %68 = vmatpush1.msra.mxu0 0.0
    %69 = vmatprep.subr.mxu0 0.0
    %70 = vmatpush1.msra.mxu0 0.0
    %71 = vmatprep.subr.mxu0 0.0
    %72 = vmatpush1.msra.mxu0 0.0
    %73 = vmatprep.subr.mxu0 0.0
    %74 = vmatpush1.msra.mxu0 0.0
    %75 = vmatprep.subr.mxu0 0.0
    %76 = vmatpush1.msra.mxu0 0.0
    %77 = vmatprep.subr.mxu0 0.0
    %78 = vmatpush1.msra.mxu0 0.0
    %79 = vmatprep.subr.mxu0 0.0
    %80 = vmatpush1.msra.mxu0 0.0
    %81 = vmatprep.subr.mxu0 0.0
    %82 = vmatpush1.msra.mxu0 0.0
    %83 = vmatprep.subr.mxu0 0.0
    %84 = vmatpush1.msra.mxu0 0.0
    %85 = vmatprep.subr.mxu0 0.0
    %86 = vmatpush1.msra.mxu0 0.0
    %87 = vmatprep.subr.mxu0 0.0
    %88 = vmatpush1.msra.mxu0 0.0
    %89 = vmatprep.subr.mxu0 0.0
    %90 = vmatpush1.msra.mxu0 0.0
    %91 = vmatprep.subr.mxu0 0.0
    %92 = vmatpush1.msra.mxu0 0.0
    %93 = vmatprep.subr.mxu0 0.0
    %94 = vmatpush1.msra.mxu0 0.0
    %95 = vmatprep.subr.mxu0 0.0
    %96 = vmatpush1.msra.mxu0 0.0
    %97 = vmatprep.subr.mxu0 0.0
    %98 = vmatpush1.msra.mxu0 0.0
    %99 = vmatprep.mubr.f32.mxu0 0.0
    %100 = vmatmul.mubr.f32.gmra.mrb[0].mxu0 %v30
    %v101 = vpop.f32.mrb[0].mxu0
    %v102 = vadd.f32 %v26, %v101
    %v103 = vpop.f32.mrb[0].mxu0
    %104 = vmatprep.mubr.f32.mxu0 0.0
    %105 = vmatmul.mubr.f32.gmra.mrb[0].mxu0 %v33
    %v106 = vpop.f32.mrb[0].mxu0
    %v107 = vadd.f32 %v26, %v106
    %v108 = vpop.f32.mrb[0].mxu0
    %109 = vdwg.mxu0
    %vm110 = vcmask 130048
    %111 = vst.msk [vmem:[#allocation2] sm:$0xff] %vm110, %v102
    %112 = vst.msk [vmem:[#allocation2 + $0x8] sm:$0xff] %vm110, %v107
    // Predicated region
    $region14: #{tpu_custom_call.1} parent=1 // pred_check
      _
    $region15: #{tpu_custom_call.1} parent=1 // pred_check_branch
      %114 = sbr.rel (0) target = $region17
    $region16: #{tpu_custom_call.1} parent=1 // pred_region
      %s116 = ssub.s32 256, 256
      %117 = vsyncadd [#allocation3], %s116
      %s118 = sshll.u32 [#allocation2], 4
      %s119 = int_to_ptr.vmem [resolvable:$true] %s118
      %124 = dma.vmem_to_hbm [thread:$0]  %s119, 256, %s3, [#allocation3], 128, 128, 8
    $region17: #{tpu_custom_call.1} parent=1 // pred_fallthru
      _
    // Predicated region
    $region18: #{tpu_custom_call.1} parent=1 // pred_check
      _
    $region19: #{tpu_custom_call.1} parent=1 // pred_check_branch
      %126 = sbr.rel (0) target = $region21
    $region20: #{tpu_custom_call.1} parent=1 // pred_region
      %127 = dma.done [#allocation3], 256
    $region21: #{tpu_custom_call.1} parent=1 // pred_fallthru
      _
    %128 = vsyncpa [#allocation3], 1

</llo_original>
